<compile_context>
chip_gen: v5e
topology: v5e:2x2
jax: 0.10.0
libtpu: 0.0.40
codegen_flags: <defaults>
</compile_context>

<pallas_src>
import functools

import jax
import jax.numpy as jnp
from jax import lax
from jax.experimental import pallas as pl
from jax.experimental.pallas import tpu as pltpu


def _round_up(x, m):
    return (x + m - 1) // m * m


def _pick_time_block(T, Bp, Hp, budget_bytes=10 * 2**20):
    """Largest divisor of T whose double-buffered proj/out blocks fit budget."""
    per_step = 4 * Bp * Hp * 4                    # proj + out blocks, x2 buffered, f32
    fixed = 2 * Hp * Hp * 2 + 3 * Bp * Hp * 4     # whh (bf16 x2) + carry + h0 (x2)
    best = 1
    for tb in range(1, T + 1):
        if T % tb == 0 and fixed + per_step * tb <= budget_bytes:
            best = tb
    return best


def _birnn_kernel(h0_ref, proj_ref, whh_ref, out_ref, h_ref, *,
                  seq_block, write_all, unroll):
    """One grid step == one direction x one block of `seq_block` timesteps."""
    tb = pl.program_id(1)

    # Load the initial memory (zeros by default) once per direction.
    @pl.when(tb == 0)
    def _():
        h_ref[...] = h0_ref[...]

    def step(i, h):
        # bf16 MXU operands, f32 accumulation; projection add + tanh in f32.
        pre = jnp.dot(h.astype(jnp.bfloat16), whh_ref[...],
                      preferred_element_type=jnp.float32) + proj_ref[i]
        h_new = jnp.tanh(pre)
        if write_all:
            out_ref[i] = h_new.astype(out_ref.dtype)
        return h_new

    h_fin = lax.fori_loop(0, seq_block, step, h_ref[...], unroll=unroll)
    h_ref[...] = h_fin

    if not write_all:
        # output_last: only the final carry is ever written back.
        @pl.when(tb == pl.num_programs(1) - 1)
        def _():
            out_ref[...] = h_fin.astype(out_ref.dtype)


@functools.partial(jax.jit, static_argnames=("output_last", "seq_block"))
def bidirectional_rnn(x, params, forward_memory=None, backward_memory=None,
                      output_last=False, seq_block=None):
    """x: (B, T, D).  Returns (B, 2, T, H), or (B, 2, H) if output_last."""
    B, T, D = x.shape
    H = params["wih_f"].shape[1]
    Bp = _round_up(B, 8)        # f32 sublane alignment
    Hp = _round_up(H, 128)      # lane alignment (lane-dense stores, full MXU)

    if seq_block is None:
        seq_block = _pick_time_block(T, Bp, Hp)
    assert T % seq_block == 0
    num_tb = T // seq_block

    f32, bf16 = jnp.float32, jnp.bfloat16
    pad_w = lambda w: jnp.pad(w, ((0, 0), (0, Hp - H)))              # (D,H)->(D,Hp)
    pad_whh = lambda w: jnp.pad(w, ((0, Hp - H), (0, Hp - H)))       # (H,H)->(Hp,Hp)
    pad_b = lambda b: jnp.pad(b, ((0, 0), (0, Hp - H)))              # (1,H)->(1,Hp)
    pad_h = lambda h: jnp.pad(h.astype(f32), ((0, Bp - B), (0, Hp - H)))

    # Time-major, batch-padded input: (T, Bp, D), bf16 for the MXU.
    xt = jnp.pad(jnp.transpose(x, (1, 0, 2)), ((0, 0), (0, Bp - B), (0, 0)))
    xt16 = xt.astype(bf16)

    # Hoisted input projections (one large bf16 GEMM per direction, f32 accum):
    #   proj[0, t] = x[:, t]     @ W_ih_f + b_f
    #   proj[1, t] = x[:, T-1-t] @ W_ih_b + b_b
    proj_f = jnp.einsum("tbd,dh->tbh", xt16, pad_w(params["wih_f"]).astype(bf16),
                        preferred_element_type=f32) + pad_b(params["b_f"])
    proj_b = jnp.einsum("tbd,dh->tbh", xt16[::-1], pad_w(params["wih_b"]).astype(bf16),
                        preferred_element_type=f32) + pad_b(params["b_b"])
    proj = jnp.stack([proj_f, proj_b], axis=0)                       # (2,T,Bp,Hp) f32

    whh = jnp.stack([pad_whh(params["whh_f"]),
                     pad_whh(params["whh_b"])], axis=0).astype(bf16)  # (2,Hp,Hp) bf16

    hf0 = pad_h(forward_memory) if forward_memory is not None else jnp.zeros((Bp, Hp), f32)
    hb0 = pad_h(backward_memory) if backward_memory is not None else jnp.zeros((Bp, Hp), f32)
    h0 = jnp.stack([hf0, hb0], axis=0)                               # (2,Bp,Hp) f32

    h0_spec = pl.BlockSpec((None, Bp, Hp), lambda d, tb: (d, 0, 0))
    proj_spec = pl.BlockSpec((None, seq_block, Bp, Hp), lambda d, tb: (d, tb, 0, 0))
    whh_spec = pl.BlockSpec((None, Hp, Hp), lambda d, tb: (d, 0, 0))

    if output_last:
        out_shape = jax.ShapeDtypeStruct((2, Bp, Hp), x.dtype)
        out_spec = pl.BlockSpec((None, Bp, Hp), lambda d, tb: (d, 0, 0))
    else:
        out_shape = jax.ShapeDtypeStruct((2, T, Bp, Hp), x.dtype)
        out_spec = pl.BlockSpec((None, seq_block, Bp, Hp), lambda d, tb: (d, tb, 0, 0))

    # Per-step VMEM estimate -> explicit scoped-VMEM limit (safe on all gens).
    est = (4 * seq_block * Bp * Hp * 4      # proj + out blocks, double-buffered f32
           + 2 * Hp * Hp * 2                # whh, double-buffered bf16
           + 3 * Bp * Hp * 4)               # carry scratch + h0 (double-buffered)
    vmem_limit = int(min(max(4 * est, 32 * 2**20), 48 * 2**20))

    unroll = int(min(seq_block, 8 if Hp <= 128 else 4))

    kernel = functools.partial(_birnn_kernel, seq_block=seq_block,
                               write_all=not output_last, unroll=unroll)

    out = pl.pallas_call(
        kernel,
        out_shape=out_shape,
        grid_spec=pltpu.PrefetchScalarGridSpec(
            num_scalar_prefetch=0,
            grid=(2, num_tb),                      # (direction, time-block)
            in_specs=[h0_spec, proj_spec, whh_spec],
            out_specs=out_spec,
            scratch_shapes=[pltpu.VMEM((Bp, Hp), jnp.float32)],   # hidden carry
        ),
        compiler_params=pltpu.CompilerParams(
            dimension_semantics=("parallel", "arbitrary"),
            vmem_limit_bytes=vmem_limit),
    )(h0, proj, whh)

    if output_last:
        return jnp.transpose(out, (1, 0, 2))[:B, :, :H]            # (B, 2, H)
    # TODO(synk): consumers that accept the (2, T, B, H) layout directly would
    # skip this extra HBM round-trip transpose.
    return jnp.transpose(out, (2, 0, 1, 3))[:B, :, :, :H]          # (B, 2, T, H)


def _reference(x, params, forward_memory=None, backward_memory=None):
    """Pure-JAX reference mirroring the PyTorch loop (bf16 matmul operands with
    f32 accumulation -- the same numerics the kernel uses)."""
    B, T, D = x.shape
    H = params["wih_f"].shape[1]
    bf16, f32 = jnp.bfloat16, jnp.float32
    dot = lambda a, b: jnp.dot(a.astype(bf16), b.astype(bf16),
                               preferred_element_type=f32)
    hf = jnp.zeros((B, H), f32) if forward_memory is None else forward_memory.astype(f32)
    hb = jnp.zeros((B, H), f32) if backward_memory is None else backward_memory.astype(f32)
    fwd, bwd = [], []
    for t in range(T):
        hf = jnp.tanh(dot(x[:, t, :], params["wih_f"])
                      + dot(hf, params["whh_f"]) + params["b_f"])
        hb = jnp.tanh(dot(x[:, T - 1 - t, :], params["wih_b"])
                      + dot(hb, params["whh_b"]) + params["b_b"])
        fwd.append(hf)
        bwd.append(hb)
    return jnp.stack([jnp.stack(fwd, 1), jnp.stack(bwd, 1)], axis=1)   # (B,2,T,H)


def _init_params(key, D, H):
    ks = jax.random.split(key, 6)
    s_in = 1.0 / jnp.sqrt(jnp.float32(D))
    s_h = 1.0 / jnp.sqrt(jnp.float32(H))
    u = lambda k, shape, s: jax.random.uniform(k, shape, jnp.float32, -s, s)
    return {
        "wih_f": u(ks[0], (D, H), s_in),
        "whh_f": u(ks[1], (H, H), s_h),
        "b_f":   u(ks[2], (1, H), s_h),
        "wih_b": u(ks[3], (D, H), s_in),
        "whh_b": u(ks[4], (H, H), s_h),
        "b_b":   u(ks[5], (1, H), s_h),
    }


if __name__ == "__main__":
    B, T, D, H = 2, 8, 16, 32
    key = jax.random.PRNGKey(0)
    kx, kp, kf, kb = jax.random.split(key, 4)
    x = jax.random.normal(kx, (B, T, D), jnp.float32)
    params = _init_params(kp, D, H)

    # 1) full-sequence output, default (zero) initial memories.
    ref = _reference(x, params)                                    # (B, 2, T, H)
    out = jax.block_until_ready(bidirectional_rnn(x, params))
    assert out.shape == (B, 2, T, H), out.shape
    assert jnp.allclose(out, ref, atol=1e-3, rtol=1e-3), "full-sequence mismatch"

    # 2) output_last path.
    out_last = jax.block_until_ready(
        bidirectional_rnn(x, params, output_last=True))            # (B, 2, H)
    ref_last = jnp.stack([ref[:, 0, -1, :], ref[:, 1, -1, :]], axis=1)
    assert out_last.shape == (B, 2, H), out_last.shape
    assert jnp.allclose(out_last, ref_last, atol=1e-3, rtol=1e-3), \
        "output_last mismatch"

    # 3) caller-provided initial memories.
    hf0 = 0.1 * jax.random.normal(kf, (B, H), jnp.float32)
    hb0 = 0.1 * jax.random.normal(kb, (B, H), jnp.float32)
    ref_m = _reference(x, params, hf0, hb0)
    out_m = jax.block_until_ready(bidirectional_rnn(x, params, hf0, hb0))
    assert jnp.allclose(out_m, ref_m, atol=1e-3, rtol=1e-3), \
        "initial-memory mismatch"

    print("KERNEL_OK")
</pallas_src>

<mosaic_0001>
module attributes {stable_mosaic.version = 11 : i64} {
  func.func @_birnn_kernel(%arg0: i32, %arg1: i32, %arg2: memref<1x8x128xf32, #tpu.memory_space<vmem>>, %arg3: memref<1x8x8x128xf32, #tpu.memory_space<vmem>>, %arg4: memref<1x128x128xbf16, #tpu.memory_space<vmem>>, %arg5: memref<1x8x8x128xf32, #tpu.memory_space<vmem>>, %arg6: memref<8x128xf32, #tpu.memory_space<vmem>>) attributes {dimension_semantics = [#tpu.dimension_semantics<parallel>, #tpu.dimension_semantics<arbitrary>], iteration_bounds = array<i64: 2, 1>, scalar_prefetch = 0 : i64, scratch_operands = 1 : i64, tpu.core_type = #tpu.core_type<tc>, window_params = [{transform_indices = @transform_0, window_bounds = array<i64: 1, 8, 128>}, {transform_indices = @transform_1, window_bounds = array<i64: 1, 8, 8, 128>}, {transform_indices = @transform_2, window_bounds = array<i64: 1, 128, 128>}, {transform_indices = @transform_3, window_bounds = array<i64: 1, 8, 8, 128>}]} {
    %c0_i32 = arith.constant 0 : i32
    %0 = arith.cmpi eq, %arg1, %c0_i32 : i32
    %1 = arith.extui %0 : i1 to i32
    %c0_i32_0 = arith.constant 0 : i32
    %2 = arith.cmpi ne, %1, %c0_i32_0 : i32
    scf.if %2 {
      %c0_84 = arith.constant 0 : index
      %c0_85 = arith.constant 0 : index
      %c0_86 = arith.constant 0 : index
      %109 = vector.load %arg2[%c0_84, %c0_85, %c0_86] : memref<1x8x128xf32, #tpu.memory_space<vmem>>, vector<1x8x128xf32>
      %110 = vector.shape_cast %109 : vector<1x8x128xf32> to vector<8x128xf32>
      %c0_87 = arith.constant 0 : index
      %c0_88 = arith.constant 0 : index
      %111 = vector.load %arg6[%c0_87, %c0_88] : memref<8x128xf32, #tpu.memory_space<vmem>>, vector<8x128xf32>
      tpu.vector_store %arg6[%c0_87, %c0_88], %110 {strides = array<i32>} : memref<8x128xf32, #tpu.memory_space<vmem>>, vector<8x128xf32>,
    } else {
    }
    %c0 = arith.constant 0 : index
    %c0_1 = arith.constant 0 : index
    %3 = vector.load %arg6[%c0, %c0_1] : memref<8x128xf32, #tpu.memory_space<vmem>>, vector<8x128xf32>
    %c0_i32_2 = arith.constant 0 : i32
    %4 = arith.truncf %3 : vector<8x128xf32> to vector<8x128xbf16>
    %c0_3 = arith.constant 0 : index
    %c0_4 = arith.constant 0 : index
    %c0_5 = arith.constant 0 : index
    %5 = vector.load %arg4[%c0_3, %c0_4, %c0_5] : memref<1x128x128xbf16, #tpu.memory_space<vmem>>, vector<1x128x128xbf16>
    %6 = vector.shape_cast %5 : vector<1x128x128xbf16> to vector<128x128xbf16>
    %cst = arith.constant dense<0.000000e+00> : vector<8x128xf32>
    %7 = tpu.matmul %4, %6, %cst {dimension_numbers = #tpu.dot_dimension_numbers<[1], [0], [0], [1], [0, 0, 1, 1], [], []>} : vector<8x128xbf16>, vector<128x128xbf16>, vector<8x128xf32> -> vector<8x128xf32>
    %c0_6 = arith.constant 0 : index
    %8 = arith.index_cast %c0_i32_2 : i32 to index
    %c0_7 = arith.constant 0 : index
    %c0_8 = arith.constant 0 : index
    %9 = vector.load %arg3[%c0_6, %8, %c0_7, %c0_8] : memref<1x8x8x128xf32, #tpu.memory_space<vmem>>, vector<1x1x8x128xf32>
    %10 = vector.shape_cast %9 : vector<1x1x8x128xf32> to vector<8x128xf32>
    %11 = arith.addf %7, %10 : vector<8x128xf32>
    %12 = math.tanh %11 : vector<8x128xf32>
    %c0_9 = arith.constant 0 : index
    %13 = arith.index_cast %c0_i32_2 : i32 to index
    %c0_10 = arith.constant 0 : index
    %c0_11 = arith.constant 0 : index
    %14 = vector.load %arg5[%c0_9, %13, %c0_10, %c0_11] : memref<1x8x8x128xf32, #tpu.memory_space<vmem>>, vector<1x1x8x128xf32>
    %15 = vector.shape_cast %14 : vector<1x1x8x128xf32> to vector<8x128xf32>
    %16 = vector.shape_cast %12 : vector<8x128xf32> to vector<1x1x8x128xf32>
    tpu.vector_store %arg5[%c0_9, %13, %c0_10, %c0_11], %16 {strides = array<i32>} : memref<1x8x8x128xf32, #tpu.memory_space<vmem>>, vector<1x1x8x128xf32>,
    %c1_i32 = arith.constant 1 : i32
    %17 = arith.truncf %12 : vector<8x128xf32> to vector<8x128xbf16>
    %c0_12 = arith.constant 0 : index
    %c0_13 = arith.constant 0 : index
    %c0_14 = arith.constant 0 : index
    %18 = vector.load %arg4[%c0_12, %c0_13, %c0_14] : memref<1x128x128xbf16, #tpu.memory_space<vmem>>, vector<1x128x128xbf16>
    %19 = vector.shape_cast %18 : vector<1x128x128xbf16> to vector<128x128xbf16>
    %cst_15 = arith.constant dense<0.000000e+00> : vector<8x128xf32>
    %20 = tpu.matmul %17, %19, %cst_15 {dimension_numbers = #tpu.dot_dimension_numbers<[1], [0], [0], [1], [0, 0, 1, 1], [], []>} : vector<8x128xbf16>, vector<128x128xbf16>, vector<8x128xf32> -> vector<8x128xf32>
    %c0_16 = arith.constant 0 : index
    %21 = arith.index_cast %c1_i32 : i32 to index
    %c0_17 = arith.constant 0 : index
    %c0_18 = arith.constant 0 : index
    %22 = vector.load %arg3[%c0_16, %21, %c0_17, %c0_18] : memref<1x8x8x128xf32, #tpu.memory_space<vmem>>, vector<1x1x8x128xf32>
    %23 = vector.shape_cast %22 : vector<1x1x8x128xf32> to vector<8x128xf32>
    %24 = arith.addf %20, %23 : vector<8x128xf32>
    %25 = math.tanh %24 : vector<8x128xf32>
    %c0_19 = arith.constant 0 : index
    %26 = arith.index_cast %c1_i32 : i32 to index
    %c0_20 = arith.constant 0 : index
    %c0_21 = arith.constant 0 : index
    %27 = vector.load %arg5[%c0_19, %26, %c0_20, %c0_21] : memref<1x8x8x128xf32, #tpu.memory_space<vmem>>, vector<1x1x8x128xf32>
    %28 = vector.shape_cast %27 : vector<1x1x8x128xf32> to vector<8x128xf32>
    %29 = vector.shape_cast %25 : vector<8x128xf32> to vector<1x1x8x128xf32>
    tpu.vector_store %arg5[%c0_19, %26, %c0_20, %c0_21], %29 {strides = array<i32>} : memref<1x8x8x128xf32, #tpu.memory_space<vmem>>, vector<1x1x8x128xf32>,
    %c2_i32 = arith.constant 2 : i32
    %30 = arith.truncf %25 : vector<8x128xf32> to vector<8x128xbf16>
    %c0_22 = arith.constant 0 : index
    %c0_23 = arith.constant 0 : index
    %c0_24 = arith.constant 0 : index
    %31 = vector.load %arg4[%c0_22, %c0_23, %c0_24] : memref<1x128x128xbf16, #tpu.memory_space<vmem>>, vector<1x128x128xbf16>
    %32 = vector.shape_cast %31 : vector<1x128x128xbf16> to vector<128x128xbf16>
    %cst_25 = arith.constant dense<0.000000e+00> : vector<8x128xf32>
    %33 = tpu.matmul %30, %32, %cst_25 {dimension_numbers = #tpu.dot_dimension_numbers<[1], [0], [0], [1], [0, 0, 1, 1], [], []>} : vector<8x128xbf16>, vector<128x128xbf16>, vector<8x128xf32> -> vector<8x128xf32>
    %c0_26 = arith.constant 0 : index
    %34 = arith.index_cast %c2_i32 : i32 to index
    %c0_27 = arith.constant 0 : index
    %c0_28 = arith.constant 0 : index
    %35 = vector.load %arg3[%c0_26, %34, %c0_27, %c0_28] : memref<1x8x8x128xf32, #tpu.memory_space<vmem>>, vector<1x1x8x128xf32>
    %36 = vector.shape_cast %35 : vector<1x1x8x128xf32> to vector<8x128xf32>
    %37 = arith.addf %33, %36 : vector<8x128xf32>
    %38 = math.tanh %37 : vector<8x128xf32>
    %c0_29 = arith.constant 0 : index
    %39 = arith.index_cast %c2_i32 : i32 to index
    %c0_30 = arith.constant 0 : index
    %c0_31 = arith.constant 0 : index
    %40 = vector.load %arg5[%c0_29, %39, %c0_30, %c0_31] : memref<1x8x8x128xf32, #tpu.memory_space<vmem>>, vector<1x1x8x128xf32>
    %41 = vector.shape_cast %40 : vector<1x1x8x128xf32> to vector<8x128xf32>
    %42 = vector.shape_cast %38 : vector<8x128xf32> to vector<1x1x8x128xf32>
    tpu.vector_store %arg5[%c0_29, %39, %c0_30, %c0_31], %42 {strides = array<i32>} : memref<1x8x8x128xf32, #tpu.memory_space<vmem>>, vector<1x1x8x128xf32>,
    %c3_i32 = arith.constant 3 : i32
    %43 = arith.truncf %38 : vector<8x128xf32> to vector<8x128xbf16>
    %c0_32 = arith.constant 0 : index
    %c0_33 = arith.constant 0 : index
    %c0_34 = arith.constant 0 : index
    %44 = vector.load %arg4[%c0_32, %c0_33, %c0_34] : memref<1x128x128xbf16, #tpu.memory_space<vmem>>, vector<1x128x128xbf16>
    %45 = vector.shape_cast %44 : vector<1x128x128xbf16> to vector<128x128xbf16>
    %cst_35 = arith.constant dense<0.000000e+00> : vector<8x128xf32>
    %46 = tpu.matmul %43, %45, %cst_35 {dimension_numbers = #tpu.dot_dimension_numbers<[1], [0], [0], [1], [0, 0, 1, 1], [], []>} : vector<8x128xbf16>, vector<128x128xbf16>, vector<8x128xf32> -> vector<8x128xf32>
    %c0_36 = arith.constant 0 : index
    %47 = arith.index_cast %c3_i32 : i32 to index
    %c0_37 = arith.constant 0 : index
    %c0_38 = arith.constant 0 : index
    %48 = vector.load %arg3[%c0_36, %47, %c0_37, %c0_38] : memref<1x8x8x128xf32, #tpu.memory_space<vmem>>, vector<1x1x8x128xf32>
    %49 = vector.shape_cast %48 : vector<1x1x8x128xf32> to vector<8x128xf32>
    %50 = arith.addf %46, %49 : vector<8x128xf32>
    %51 = math.tanh %50 : vector<8x128xf32>
    %c0_39 = arith.constant 0 : index
    %52 = arith.index_cast %c3_i32 : i32 to index
    %c0_40 = arith.constant 0 : index
    %c0_41 = arith.constant 0 : index
    %53 = vector.load %arg5[%c0_39, %52, %c0_40, %c0_41] : memref<1x8x8x128xf32, #tpu.memory_space<vmem>>, vector<1x1x8x128xf32>
    %54 = vector.shape_cast %53 : vector<1x1x8x128xf32> to vector<8x128xf32>
    %55 = vector.shape_cast %51 : vector<8x128xf32> to vector<1x1x8x128xf32>
    tpu.vector_store %arg5[%c0_39, %52, %c0_40, %c0_41], %55 {strides = array<i32>} : memref<1x8x8x128xf32, #tpu.memory_space<vmem>>, vector<1x1x8x128xf32>,
    %c4_i32 = arith.constant 4 : i32
    %56 = arith.truncf %51 : vector<8x128xf32> to vector<8x128xbf16>
    %c0_42 = arith.constant 0 : index
    %c0_43 = arith.constant 0 : index
    %c0_44 = arith.constant 0 : index
    %57 = vector.load %arg4[%c0_42, %c0_43, %c0_44] : memref<1x128x128xbf16, #tpu.memory_space<vmem>>, vector<1x128x128xbf16>
    %58 = vector.shape_cast %57 : vector<1x128x128xbf16> to vector<128x128xbf16>
    %cst_45 = arith.constant dense<0.000000e+00> : vector<8x128xf32>
    %59 = tpu.matmul %56, %58, %cst_45 {dimension_numbers = #tpu.dot_dimension_numbers<[1], [0], [0], [1], [0, 0, 1, 1], [], []>} : vector<8x128xbf16>, vector<128x128xbf16>, vector<8x128xf32> -> vector<8x128xf32>
    %c0_46 = arith.constant 0 : index
    %60 = arith.index_cast %c4_i32 : i32 to index
    %c0_47 = arith.constant 0 : index
    %c0_48 = arith.constant 0 : index
    %61 = vector.load %arg3[%c0_46, %60, %c0_47, %c0_48] : memref<1x8x8x128xf32, #tpu.memory_space<vmem>>, vector<1x1x8x128xf32>
    %62 = vector.shape_cast %61 : vector<1x1x8x128xf32> to vector<8x128xf32>
    %63 = arith.addf %59, %62 : vector<8x128xf32>
    %64 = math.tanh %63 : vector<8x128xf32>
    %c0_49 = arith.constant 0 : index
    %65 = arith.index_cast %c4_i32 : i32 to index
    %c0_50 = arith.constant 0 : index
    %c0_51 = arith.constant 0 : index
    %66 = vector.load %arg5[%c0_49, %65, %c0_50, %c0_51] : memref<1x8x8x128xf32, #tpu.memory_space<vmem>>, vector<1x1x8x128xf32>
    %67 = vector.shape_cast %66 : vector<1x1x8x128xf32> to vector<8x128xf32>
    %68 = vector.shape_cast %64 : vector<8x128xf32> to vector<1x1x8x128xf32>
    tpu.vector_store %arg5[%c0_49, %65, %c0_50, %c0_51], %68 {strides = array<i32>} : memref<1x8x8x128xf32, #tpu.memory_space<vmem>>, vector<1x1x8x128xf32>,
    %c5_i32 = arith.constant 5 : i32
    %69 = arith.truncf %64 : vector<8x128xf32> to vector<8x128xbf16>
    %c0_52 = arith.constant 0 : index
    %c0_53 = arith.constant 0 : index
    %c0_54 = arith.constant 0 : index
    %70 = vector.load %arg4[%c0_52, %c0_53, %c0_54] : memref<1x128x128xbf16, #tpu.memory_space<vmem>>, vector<1x128x128xbf16>
    %71 = vector.shape_cast %70 : vector<1x128x128xbf16> to vector<128x128xbf16>
    %cst_55 = arith.constant dense<0.000000e+00> : vector<8x128xf32>
    %72 = tpu.matmul %69, %71, %cst_55 {dimension_numbers = #tpu.dot_dimension_numbers<[1], [0], [0], [1], [0, 0, 1, 1], [], []>} : vector<8x128xbf16>, vector<128x128xbf16>, vector<8x128xf32> -> vector<8x128xf32>
    %c0_56 = arith.constant 0 : index
    %73 = arith.index_cast %c5_i32 : i32 to index
    %c0_57 = arith.constant 0 : index
    %c0_58 = arith.constant 0 : index
    %74 = vector.load %arg3[%c0_56, %73, %c0_57, %c0_58] : memref<1x8x8x128xf32, #tpu.memory_space<vmem>>, vector<1x1x8x128xf32>
    %75 = vector.shape_cast %74 : vector<1x1x8x128xf32> to vector<8x128xf32>
    %76 = arith.addf %72, %75 : vector<8x128xf32>
    %77 = math.tanh %76 : vector<8x128xf32>
    %c0_59 = arith.constant 0 : index
    %78 = arith.index_cast %c5_i32 : i32 to index
    %c0_60 = arith.constant 0 : index
    %c0_61 = arith.constant 0 : index
    %79 = vector.load %arg5[%c0_59, %78, %c0_60, %c0_61] : memref<1x8x8x128xf32, #tpu.memory_space<vmem>>, vector<1x1x8x128xf32>
    %80 = vector.shape_cast %79 : vector<1x1x8x128xf32> to vector<8x128xf32>
    %81 = vector.shape_cast %77 : vector<8x128xf32> to vector<1x1x8x128xf32>
    tpu.vector_store %arg5[%c0_59, %78, %c0_60, %c0_61], %81 {strides = array<i32>} : memref<1x8x8x128xf32, #tpu.memory_space<vmem>>, vector<1x1x8x128xf32>,
    %c6_i32 = arith.constant 6 : i32
    %82 = arith.truncf %77 : vector<8x128xf32> to vector<8x128xbf16>
    %c0_62 = arith.constant 0 : index
    %c0_63 = arith.constant 0 : index
    %c0_64 = arith.constant 0 : index
    %83 = vector.load %arg4[%c0_62, %c0_63, %c0_64] : memref<1x128x128xbf16, #tpu.memory_space<vmem>>, vector<1x128x128xbf16>
    %84 = vector.shape_cast %83 : vector<1x128x128xbf16> to vector<128x128xbf16>
    %cst_65 = arith.constant dense<0.000000e+00> : vector<8x128xf32>
    %85 = tpu.matmul %82, %84, %cst_65 {dimension_numbers = #tpu.dot_dimension_numbers<[1], [0], [0], [1], [0, 0, 1, 1], [], []>} : vector<8x128xbf16>, vector<128x128xbf16>, vector<8x128xf32> -> vector<8x128xf32>
    %c0_66 = arith.constant 0 : index
    %86 = arith.index_cast %c6_i32 : i32 to index
    %c0_67 = arith.constant 0 : index
    %c0_68 = arith.constant 0 : index
    %87 = vector.load %arg3[%c0_66, %86, %c0_67, %c0_68] : memref<1x8x8x128xf32, #tpu.memory_space<vmem>>, vector<1x1x8x128xf32>
    %88 = vector.shape_cast %87 : vector<1x1x8x128xf32> to vector<8x128xf32>
    %89 = arith.addf %85, %88 : vector<8x128xf32>
    %90 = math.tanh %89 : vector<8x128xf32>
    %c0_69 = arith.constant 0 : index
    %91 = arith.index_cast %c6_i32 : i32 to index
    %c0_70 = arith.constant 0 : index
    %c0_71 = arith.constant 0 : index
    %92 = vector.load %arg5[%c0_69, %91, %c0_70, %c0_71] : memref<1x8x8x128xf32, #tpu.memory_space<vmem>>, vector<1x1x8x128xf32>
    %93 = vector.shape_cast %92 : vector<1x1x8x128xf32> to vector<8x128xf32>
    %94 = vector.shape_cast %90 : vector<8x128xf32> to vector<1x1x8x128xf32>
    tpu.vector_store %arg5[%c0_69, %91, %c0_70, %c0_71], %94 {strides = array<i32>} : memref<1x8x8x128xf32, #tpu.memory_space<vmem>>, vector<1x1x8x128xf32>,
    %c7_i32 = arith.constant 7 : i32
    %95 = arith.truncf %90 : vector<8x128xf32> to vector<8x128xbf16>
    %c0_72 = arith.constant 0 : index
    %c0_73 = arith.constant 0 : index
    %c0_74 = arith.constant 0 : index
    %96 = vector.load %arg4[%c0_72, %c0_73, %c0_74] : memref<1x128x128xbf16, #tpu.memory_space<vmem>>, vector<1x128x128xbf16>
    %97 = vector.shape_cast %96 : vector<1x128x128xbf16> to vector<128x128xbf16>
    %cst_75 = arith.constant dense<0.000000e+00> : vector<8x128xf32>
    %98 = tpu.matmul %95, %97, %cst_75 {dimension_numbers = #tpu.dot_dimension_numbers<[1], [0], [0], [1], [0, 0, 1, 1], [], []>} : vector<8x128xbf16>, vector<128x128xbf16>, vector<8x128xf32> -> vector<8x128xf32>
    %c0_76 = arith.constant 0 : index
    %99 = arith.index_cast %c7_i32 : i32 to index
    %c0_77 = arith.constant 0 : index
    %c0_78 = arith.constant 0 : index
    %100 = vector.load %arg3[%c0_76, %99, %c0_77, %c0_78] : memref<1x8x8x128xf32, #tpu.memory_space<vmem>>, vector<1x1x8x128xf32>
    %101 = vector.shape_cast %100 : vector<1x1x8x128xf32> to vector<8x128xf32>
    %102 = arith.addf %98, %101 : vector<8x128xf32>
    %103 = math.tanh %102 : vector<8x128xf32>
    %c0_79 = arith.constant 0 : index
    %104 = arith.index_cast %c7_i32 : i32 to index
    %c0_80 = arith.constant 0 : index
    %c0_81 = arith.constant 0 : index
    %105 = vector.load %arg5[%c0_79, %104, %c0_80, %c0_81] : memref<1x8x8x128xf32, #tpu.memory_space<vmem>>, vector<1x1x8x128xf32>
    %106 = vector.shape_cast %105 : vector<1x1x8x128xf32> to vector<8x128xf32>
    %107 = vector.shape_cast %103 : vector<8x128xf32> to vector<1x1x8x128xf32>
    tpu.vector_store %arg5[%c0_79, %104, %c0_80, %c0_81], %107 {strides = array<i32>} : memref<1x8x8x128xf32, #tpu.memory_space<vmem>>, vector<1x1x8x128xf32>,
    %c8_i32 = arith.constant 8 : i32
    %c0_82 = arith.constant 0 : index
    %c0_83 = arith.constant 0 : index
    %108 = vector.load %arg6[%c0_82, %c0_83] : memref<8x128xf32, #tpu.memory_space<vmem>>, vector<8x128xf32>
    tpu.vector_store %arg6[%c0_82, %c0_83], %103 {strides = array<i32>} : memref<8x128xf32, #tpu.memory_space<vmem>>, vector<8x128xf32>,
    return
  }
  func.func @transform_0(%arg0: i32, %arg1: i32) -> (i32, i32, i32) {
    %c0_i32 = arith.constant 0 : i32
    %c0_i32_0 = arith.constant 0 : i32
    %c0_i32_1 = arith.constant 0 : i32
    return %arg0, %c0_i32, %c0_i32_0 : i32, i32, i32
  }
  func.func @transform_1(%arg0: i32, %arg1: i32) -> (i32, i32, i32, i32) {
    %c0_i32 = arith.constant 0 : i32
    %c0_i32_0 = arith.constant 0 : i32
    %c0_i32_1 = arith.constant 0 : i32
    return %arg0, %arg1, %c0_i32, %c0_i32_0 : i32, i32, i32, i32
  }
  func.func @transform_2(%arg0: i32, %arg1: i32) -> (i32, i32, i32) {
    %c0_i32 = arith.constant 0 : i32
    %c0_i32_0 = arith.constant 0 : i32
    %c0_i32_1 = arith.constant 0 : i32
    return %arg0, %c0_i32, %c0_i32_0 : i32, i32, i32
  }
  func.func @transform_3(%arg0: i32, %arg1: i32) -> (i32, i32, i32, i32) {
    %c0_i32 = arith.constant 0 : i32
    %c0_i32_0 = arith.constant 0 : i32
    %c0_i32_1 = arith.constant 0 : i32
    return %arg0, %arg1, %c0_i32, %c0_i32_0 : i32, i32, i32, i32
  }
}

</mosaic_0001>

<llo_original>
// kernel: bidirectional_rnn.1
$region0: #{bidirectional_rnn.1}
  #allocation0 [shape = 'u32[]', space=smem, size = 0x4, offset = 0x4, fixed_abs, tag = 'smem constant byte address 0x4 - core index']
  #allocation1 [shape = 'u32[72,128]{1,0:T(1,128)}', space=vmem, size = 0x9000, scoped, tag = 'internal scratch']
  #allocation2 [shape = 'f32[8,128]{1,0:T(8,128)}', space=vmem, size = 0x1000, scoped, tag = 'scratch operand']
  %s0 = inlined_call_operand.vmem [shape: f32[2,8,128], index: 0, kind: input, shape index: {}]
  %s1 = inlined_call_operand.vmem [shape: f32[2,8,8,128], index: 1, kind: input, shape index: {}]
  %s2 = inlined_call_operand.vmem [shape: bf16[2,128,128], index: 2, kind: input, shape index: {}]
  %s3 = inlined_call_operand.vmem [shape: f32[2,8,8,128], index: 3, kind: output, shape index: {}]
  %s4 = sld [smem:[#allocation0]]
  $region49: #{bidirectional_rnn.1} parent=0
    _
  %s6 = ssub.s32 1, %s4
  %s7 = scalar_select 0, %s6, %s4
  loop: start=0, step=1, limit=4
  $region2: #{bidirectional_rnn.1} parent=0 // loop_pre_header
    _
  $region3: #{bidirectional_rnn.1} parent=0 // loop_header
    %s9 = sphi 0, %s13
    %p10 = scmp.ge.s32.totalorder %s9, 4
    %s16 = sphi 0, %s28
    %s17 = sphi 0, %s24
    %s18 = sphi 0, %s16
    %s19 = sphi 0, %s17
    %s20 = sphi 0, %s18
    %s21 = sphi 0, %s19
    %s31 = sphi 0, %s33
    %s34 = sphi 0, %s31
    %s35 = sphi 0, %s34
    %s51 = sphi 0, %s35
    %s59 = sphi 0, %s61
    %s62 = sphi 0, %s59
    %s63 = sphi 0, %s62
    %s79 = sphi 0, %s63
    %s85 = sphi 0, %s87
    %s88 = sphi 0, %s85
    %s89 = sphi 0, %s88
    %s105 = sphi 0, %s89
    %s113 = sphi 0, %s115
    %s116 = sphi 0, %s113
    %s117 = sphi 0, %s116
    %s133 = sphi 0, %s117
  $region4: #{bidirectional_rnn.1} parent=0 // loop_header_branch
    %12 = sbr.rel (%p10) target = $region8
  $region5: #{bidirectional_rnn.1} parent=0 // loop_body
    %s14 = ssub.s32 %s9, 1
    %s15 = ssub.s32 %s9, 2
    %s22 = sadd.s32 1, %s17
    %p23 = scmp.ge.s32.totalorder %s22, 1
    %s24 = scalar_select %p23, 0, %s22
    %s25 = sadd.s32 1, %s16
    %s26 = scalar_select %p23, %s25, %s16
    %p27 = scmp.ge.s32.totalorder %s26, 2
    %s28 = scalar_select %p27, 0, %s26
    %s29 = ssub.s32 %s16, %s28
    %p30 = scmp.eq.s32.totalorder %s29, 0
    %s32 = sadd.s32 %s31, 1
    %s33 = scalar_select %p30, %s31, %s32
    %p36 = pneg %p30
    %p37 = scmp.eq.s32.totalorder %s9, 1
    %p38 = por %p36, %p37
    %p39 = scmp.ne.s32.totalorder %s31, %s34
    %p40 = scmp.eq.s32.totalorder %s9, 0
    %p41 = por %p39, %p40
    %p42 = scmp.ne.s32.totalorder %s31, %s34
    %p43 = scmp.eq.s32.totalorder %s14, 1
    %p44 = por %p42, %p43
    %p45 = scmp.ne.s32.totalorder %s34, %s35
    %p46 = scmp.eq.s32.totalorder %s14, 0
    %p47 = por %p45, %p46
    %p48 = scmp.ne.s32.totalorder %s34, %s35
    %p49 = scmp.eq.s32.totalorder %s15, 1
    %p50 = por %p48, %p49
    %p52 = scmp.ne.s32.totalorder %s35, %s51
    %p53 = scmp.eq.s32.totalorder %s15, 0
    %p54 = por %p52, %p53
    %s55 = ssub.s32 %s16, %s28
    %s56 = ssub.s32 %s17, %s24
    %s57 = sor.u32 %s55, %s56
    %p58 = scmp.eq.s32.totalorder %s57, 0
    %s60 = sadd.s32 %s59, 1
    %s61 = scalar_select %p58, %s59, %s60
    %p64 = pneg %p58
    %p65 = scmp.eq.s32.totalorder %s9, 1
    %p66 = por %p64, %p65
    %p67 = scmp.ne.s32.totalorder %s59, %s62
    %p68 = scmp.eq.s32.totalorder %s9, 0
    %p69 = por %p67, %p68
    %p70 = scmp.ne.s32.totalorder %s59, %s62
    %p71 = scmp.eq.s32.totalorder %s14, 1
    %p72 = por %p70, %p71
    %p73 = scmp.ne.s32.totalorder %s62, %s63
    %p74 = scmp.eq.s32.totalorder %s14, 0
    %p75 = por %p73, %p74
    %p76 = scmp.ne.s32.totalorder %s62, %s63
    %p77 = scmp.eq.s32.totalorder %s15, 1
    %p78 = por %p76, %p77
    %p80 = scmp.ne.s32.totalorder %s63, %s79
    %p81 = scmp.eq.s32.totalorder %s15, 0
    %p82 = por %p80, %p81
    %s83 = ssub.s32 %s16, %s28
    %p84 = scmp.eq.s32.totalorder %s83, 0
    %s86 = sadd.s32 %s85, 1
    %s87 = scalar_select %p84, %s85, %s86
    %p90 = pneg %p84
    %p91 = scmp.eq.s32.totalorder %s9, 1
    %p92 = por %p90, %p91
    %p93 = scmp.ne.s32.totalorder %s85, %s88
    %p94 = scmp.eq.s32.totalorder %s9, 0
    %p95 = por %p93, %p94
    %p96 = scmp.ne.s32.totalorder %s85, %s88
    %p97 = scmp.eq.s32.totalorder %s14, 1
    %p98 = por %p96, %p97
    %p99 = scmp.ne.s32.totalorder %s88, %s89
    %p100 = scmp.eq.s32.totalorder %s14, 0
    %p101 = por %p99, %p100
    %p102 = scmp.ne.s32.totalorder %s88, %s89
    %p103 = scmp.eq.s32.totalorder %s15, 1
    %p104 = por %p102, %p103
    %p106 = scmp.ne.s32.totalorder %s89, %s105
    %p107 = scmp.eq.s32.totalorder %s15, 0
    %p108 = por %p106, %p107
    %s109 = ssub.s32 %s16, %s28
    %s110 = ssub.s32 %s17, %s24
    %s111 = sor.u32 %s109, %s110
    %p112 = scmp.eq.s32.totalorder %s111, 0
    %s114 = sadd.s32 %s113, 1
    %s115 = scalar_select %p112, %s113, %s114
    %p118 = pneg %p112
    %p119 = scmp.eq.s32.totalorder %s9, 1
    %p120 = por %p118, %p119
    %p121 = scmp.ne.s32.totalorder %s113, %s116
    %p122 = scmp.eq.s32.totalorder %s9, 0
    %p123 = por %p121, %p122
    %p124 = scmp.ne.s32.totalorder %s113, %s116
    %p125 = scmp.eq.s32.totalorder %s14, 1
    %p126 = por %p124, %p125
    %p127 = scmp.ne.s32.totalorder %s116, %s117
    %p128 = scmp.eq.s32.totalorder %s14, 0
    %p129 = por %p127, %p128
    %p130 = scmp.ne.s32.totalorder %s116, %s117
    %p131 = scmp.eq.s32.totalorder %s15, 1
    %p132 = por %p130, %p131
    %p134 = scmp.ne.s32.totalorder %s117, %s133
    %p135 = scmp.eq.s32.totalorder %s15, 0
    %p136 = por %p134, %p135
    %p137 = scmp.le.s32.totalorder 1, %s9
    %p138 = scmp.lt.s32.totalorder %s9, 3
    %p139 = pnand %p137, %p138
    %p140 = pneg %p139
    // Predicated region
    $region9: #{bidirectional_rnn.1} parent=5 // pred_check
      _
    $region10: #{bidirectional_rnn.1} parent=5 // pred_check_branch
      %142 = sbr.rel (%p139) target = $region12
    $region11: #{bidirectional_rnn.1} parent=5 // pred_region
      %s143 = ssub.s32 %s9, 1
    $region12: #{bidirectional_rnn.1} parent=5 // pred_fallthru
      _
    %p144 = scmp.lt.s32.totalorder %s9, 2
    // Predicated region
    $region13: #{bidirectional_rnn.1} parent=5 // pred_check
      %p145 = pneg %p144
    $region14: #{bidirectional_rnn.1} parent=5 // pred_check_branch
      %147 = sbr.rel (%p145) target = $region16
    $region15: #{bidirectional_rnn.1} parent=5 // pred_region
      // Predicated region
      $region17: #{bidirectional_rnn.1} parent=15 // pred_check
        %p148 = pneg %p41
      $region18: #{bidirectional_rnn.1} parent=15 // pred_check_branch
        %150 = sbr.rel (%p148) target = $region20
      $region19: #{bidirectional_rnn.1} parent=15 // pred_region
        %p151 = scmp.lt.s32.totalorder %s16, 1
        %s152 = scalar_select %p151, %s16, 1
        %s153 = smul.addr %s152, 8
        %s154 = scalar_lea.vmem %s0, %s153
      $region20: #{bidirectional_rnn.1} parent=15 // pred_fallthru
        _
      // Predicated region
      $region21: #{bidirectional_rnn.1} parent=15 // pred_check
        %p155 = pneg %p69
      $region22: #{bidirectional_rnn.1} parent=15 // pred_check_branch
        %157 = sbr.rel (%p155) target = $region24
      $region23: #{bidirectional_rnn.1} parent=15 // pred_region
        %s158 = smul.u32 8, %s17
        %p159 = scmp.lt.s32.totalorder %s16, 1
        %s160 = scalar_select %p159, %s16, 1
        %p161 = scmp.lt.s32.totalorder %s158, 7
        %s162 = scalar_select %p161, %s158, 7
        %s163 = smul.addr %s160, 8
        %s164 = sadd.s32 %s162, %s163
        %s165 = smul.addr %s164, 8
        %s166 = scalar_lea.vmem %s1, %s165
        %s167 = smul.u32 8, %s17
      $region24: #{bidirectional_rnn.1} parent=15 // pred_fallthru
        _
      // Predicated region
      $region25: #{bidirectional_rnn.1} parent=15 // pred_check
        %p168 = pneg %p95
      $region26: #{bidirectional_rnn.1} parent=15 // pred_check_branch
        %170 = sbr.rel (%p168) target = $region28
      $region27: #{bidirectional_rnn.1} parent=15 // pred_region
        %p171 = scmp.lt.s32.totalorder %s16, 1
        %s172 = scalar_select %p171, %s16, 1
        %s173 = smul.addr %s172, 16
        %s174 = smul.addr %s173, 4
        %s175 = scalar_lea.vmem %s2, %s174
      $region28: #{bidirectional_rnn.1} parent=15 // pred_fallthru
        _
    $region16: #{bidirectional_rnn.1} parent=5 // pred_fallthru
      _
    %p176 = scmp.le.s32.totalorder 1, %s9
    %p177 = scmp.lt.s32.totalorder %s9, 3
    %p178 = pnand %p176, %p177
    %p179 = pneg %p178
    // Predicated region
    $region29: #{bidirectional_rnn.1} parent=5 // pred_check
      _
    $region30: #{bidirectional_rnn.1} parent=5 // pred_check_branch
      %181 = sbr.rel (%p178) target = $region32
    $region31: #{bidirectional_rnn.1} parent=5 // pred_region
      %s182 = ssub.s32 %s9, 1
      %p183 = scmp.lt.s32.totalorder %s18, 1
      %s184 = scalar_select %p183, %s18, 1
      %s185 = smul.addr %s184, 8
      %s186 = scalar_lea.vmem %s0, %s185
      %p187 = pneg %p47
      %p188 = pneg %p44
      %s189 = smul.u32 8, %s19
      %p190 = scmp.lt.s32.totalorder %s18, 1
      %s191 = scalar_select %p190, %s18, 1
      %p192 = scmp.lt.s32.totalorder %s189, 7
      %s193 = scalar_select %p192, %s189, 7
      %s194 = smul.addr %s191, 8
      %s195 = sadd.s32 %s193, %s194
      %s196 = smul.addr %s195, 8
      %s197 = scalar_lea.vmem %s1, %s196
      %p198 = pneg %p75
      %p199 = pneg %p72
      %p200 = scmp.lt.s32.totalorder %s18, 1
      %s201 = scalar_select %p200, %s18, 1
      %s202 = smul.addr %s201, 16
      %s203 = smul.addr %s202, 4
      %s204 = scalar_lea.vmem %s2, %s203
      %p205 = pneg %p101
      %p206 = pneg %p98
      %p207 = pneg %p129
      %p208 = pneg %p126
      %s209 = smul.u32 8, %s19
      %p210 = scmp.lt.s32.totalorder %s18, 1
      %s211 = scalar_select %p210, %s18, 1
      %p212 = scmp.lt.s32.totalorder %s209, 7
      %s213 = scalar_select %p212, %s209, 7
      %s214 = smul.addr %s211, 8
      %s215 = sadd.s32 %s213, %s214
      %s216 = smul.addr %s215, 8
      %s217 = scalar_lea.vmem %s3, %s216
      %p218 = scmp.lt.s32.totalorder %s18, 1
      %s219 = scalar_select %p218, %s18, 1
      %s220 = smul.addr %s219, 8
      %s221 = scalar_lea.vmem %s0, %s220
      %s222 = smul.u32 8, %s19
      %p223 = scmp.lt.s32.totalorder %s18, 1
      %s224 = scalar_select %p223, %s18, 1
      %p225 = scmp.lt.s32.totalorder %s222, 7
      %s226 = scalar_select %p225, %s222, 7
      %s227 = smul.addr %s224, 8
      %s228 = sadd.s32 %s226, %s227
      %s229 = smul.addr %s228, 8
      %s230 = scalar_lea.vmem %s1, %s229
      %s231 = smul.u32 8, %s19
      %p232 = scmp.lt.s32.totalorder %s18, 1
      %s233 = scalar_select %p232, %s18, 1
      %s234 = smul.addr %s233, 16
      %s235 = smul.addr %s234, 4
      %s236 = scalar_lea.vmem %s2, %s235
      %s237 = smul.u32 8, %s19
      %p238 = scmp.lt.s32.totalorder %s18, 1
      %s239 = scalar_select %p238, %s18, 1
      %p240 = scmp.lt.s32.totalorder %s237, 7
      %s241 = scalar_select %p240, %s237, 7
      %s242 = smul.addr %s239, 8
      %s243 = sadd.s32 %s241, %s242
      %s244 = smul.addr %s243, 8
      %s245 = scalar_lea.vmem %s3, %s244
      %s246 = smul.u32 8, %s19
      %p247 = scmp.eq.s32.totalorder %s19, 0
      // Predicated region
      $region33: #{bidirectional_rnn.1} parent=31 // pred_check
        %p248 = pneg %p247
      $region34: #{bidirectional_rnn.1} parent=31 // pred_check_branch
        %250 = sbr.rel (%p248) target = $region36
      $region35: #{bidirectional_rnn.1} parent=31 // pred_region
        %v251 = vld [vmem:[%s221] sm:$0xff]
        %252 = vst [vmem:[#allocation2] sm:$0xff] %v251
      $region36: #{bidirectional_rnn.1} parent=31 // pred_fallthru
        _
      %v253 = vld [vmem:[#allocation2] sm:$0xff]
      %v254 = vpack.c.bf16 %v253, %v253
      %v255 = vld [vmem:[%s236] sm:$0xf]
      %v256 = vld [vmem:[%s236 + $0x4] sm:$0xf]
      %v257 = vld [vmem:[%s236 + $0x8] sm:$0xf]
      %v258 = vld [vmem:[%s236 + $0xc] sm:$0xf]
      %v259 = vld [vmem:[%s236 + $0x10] sm:$0xf]
      %v260 = vld [vmem:[%s236 + $0x14] sm:$0xf]
      %v261 = vld [vmem:[%s236 + $0x18] sm:$0xf]
      %v262 = vld [vmem:[%s236 + $0x1c] sm:$0xf]
      %v263 = vld [vmem:[%s236 + $0x20] sm:$0xf]
      %v264 = vld [vmem:[%s236 + $0x24] sm:$0xf]
      %v265 = vld [vmem:[%s236 + $0x28] sm:$0xf]
      %v266 = vld [vmem:[%s236 + $0x2c] sm:$0xf]
      %v267 = vld [vmem:[%s236 + $0x30] sm:$0xf]
      %v268 = vld [vmem:[%s236 + $0x34] sm:$0xf]
      %v269 = vld [vmem:[%s236 + $0x38] sm:$0xf]
      %v270 = vld [vmem:[%s236 + $0x3c] sm:$0xf]
      %v271 = vld [vmem:[%s230] sm:$0xff]
      %v288 = vunpack.c.l.b16 %v255
      %v289 = vunpack.c.l.b16 %v256
      %v290 = vunpack.c.l.b16 %v257
      %v291 = vunpack.c.l.b16 %v258
      %v292 = vunpack.c.l.b16 %v259
      %v293 = vunpack.c.l.b16 %v260
      %v294 = vunpack.c.l.b16 %v261
      %v295 = vunpack.c.l.b16 %v262
      %v296 = vunpack.c.l.b16 %v263
      %v297 = vunpack.c.l.b16 %v264
      %v298 = vunpack.c.l.b16 %v265
      %v299 = vunpack.c.l.b16 %v266
      %v300 = vunpack.c.l.b16 %v267
      %v301 = vunpack.c.l.b16 %v268
      %v302 = vunpack.c.l.b16 %v269
      %v303 = vunpack.c.l.b16 %v270
      %v304 = vpack.c.b16 %v289, %v288
      %v305 = vpack.c.b16 %v291, %v290
      %v306 = vpack.c.b16 %v293, %v292
      %v307 = vpack.c.b16 %v295, %v294
      %v308 = vpack.c.b16 %v297, %v296
      %v309 = vpack.c.b16 %v299, %v298
      %v310 = vpack.c.b16 %v301, %v300
      %v311 = vpack.c.b16 %v303, %v302
      %320 = vmatpush.bf16.msra.mxu0 %v311
      %321 = vmatpush.bf16.msra.mxu0 %v310
      %322 = vmatpush.bf16.msra.mxu0 %v309
      %323 = vmatpush.bf16.msra.mxu0 %v308
      %324 = vmatpush.bf16.msra.mxu0 %v307
      %325 = vmatpush.bf16.msra.mxu0 %v306
      %326 = vmatpush.bf16.msra.mxu0 %v305
      %327 = vmatpush.bf16.msra.mxu0 %v304
      %328 = vmatmul.bf16.gmra.mxu0 %v254
      %v329 = vpop.f32.mrf.mxu0
      %v330 = vadd.f32 %v271, %v329
      %v331 = vpop.f32.mrf.mxu0
      %332 = vdwg.mxu0
      %v333 = vtanh.pop %v330
      %334 = vst [vmem:[%s245] sm:$0xff] %v333
      %v335 = vpack.c.bf16 %v333, %v333
      %v336 = vld [vmem:[%s236] sm:$0xf]
      %v337 = vld [vmem:[%s236 + $0x4] sm:$0xf]
      %v338 = vld [vmem:[%s236 + $0x8] sm:$0xf]
      %v339 = vld [vmem:[%s236 + $0xc] sm:$0xf]
      %v340 = vld [vmem:[%s236 + $0x10] sm:$0xf]
      %v341 = vld [vmem:[%s236 + $0x14] sm:$0xf]
      %v342 = vld [vmem:[%s236 + $0x18] sm:$0xf]
      %v343 = vld [vmem:[%s236 + $0x1c] sm:$0xf]
      %v344 = vld [vmem:[%s236 + $0x20] sm:$0xf]
      %v345 = vld [vmem:[%s236 + $0x24] sm:$0xf]
      %v346 = vld [vmem:[%s236 + $0x28] sm:$0xf]
      %v347 = vld [vmem:[%s236 + $0x2c] sm:$0xf]
      %v348 = vld [vmem:[%s236 + $0x30] sm:$0xf]
      %v349 = vld [vmem:[%s236 + $0x34] sm:$0xf]
      %v350 = vld [vmem:[%s236 + $0x38] sm:$0xf]
      %v351 = vld [vmem:[%s236 + $0x3c] sm:$0xf]
      %s352 = scalar_lea.vmem %s230, 8
      %v353 = vld [vmem:[%s352] sm:$0xff]
      %v370 = vunpack.c.l.b16 %v336
      %v371 = vunpack.c.l.b16 %v337
      %v372 = vunpack.c.l.b16 %v338
      %v373 = vunpack.c.l.b16 %v339
      %v374 = vunpack.c.l.b16 %v340
      %v375 = vunpack.c.l.b16 %v341
      %v376 = vunpack.c.l.b16 %v342
      %v377 = vunpack.c.l.b16 %v343
      %v378 = vunpack.c.l.b16 %v344
      %v379 = vunpack.c.l.b16 %v345
      %v380 = vunpack.c.l.b16 %v346
      %v381 = vunpack.c.l.b16 %v347
      %v382 = vunpack.c.l.b16 %v348
      %v383 = vunpack.c.l.b16 %v349
      %v384 = vunpack.c.l.b16 %v350
      %v385 = vunpack.c.l.b16 %v351
      %v386 = vpack.c.b16 %v371, %v370
      %v387 = vpack.c.b16 %v373, %v372
      %v388 = vpack.c.b16 %v375, %v374
      %v389 = vpack.c.b16 %v377, %v376
      %v390 = vpack.c.b16 %v379, %v378
      %v391 = vpack.c.b16 %v381, %v380
      %v392 = vpack.c.b16 %v383, %v382
      %v393 = vpack.c.b16 %v385, %v384
      %402 = vmatpush.bf16.msra.mxu0 %v393
      %403 = vmatpush.bf16.msra.mxu0 %v392
      %404 = vmatpush.bf16.msra.mxu0 %v391
      %405 = vmatpush.bf16.msra.mxu0 %v390
      %406 = vmatpush.bf16.msra.mxu0 %v389
      %407 = vmatpush.bf16.msra.mxu0 %v388
      %408 = vmatpush.bf16.msra.mxu0 %v387
      %409 = vmatpush.bf16.msra.mxu0 %v386
      %410 = vmatmul.bf16.gmra.mxu0 %v335
      %v411 = vpop.f32.mrf.mxu0
      %v412 = vadd.f32 %v353, %v411
      %v413 = vpop.f32.mrf.mxu0
      %414 = vdwg.mxu0
      %v415 = vtanh.pop %v412
      %s416 = scalar_lea.vmem %s245, 8
      %417 = vst [vmem:[%s416] sm:$0xff] %v415
      %v418 = vpack.c.bf16 %v415, %v415
      %v419 = vld [vmem:[%s236] sm:$0xf]
      %v420 = vld [vmem:[%s236 + $0x4] sm:$0xf]
      %v421 = vld [vmem:[%s236 + $0x8] sm:$0xf]
      %v422 = vld [vmem:[%s236 + $0xc] sm:$0xf]
      %v423 = vld [vmem:[%s236 + $0x10] sm:$0xf]
      %v424 = vld [vmem:[%s236 + $0x14] sm:$0xf]
      %v425 = vld [vmem:[%s236 + $0x18] sm:$0xf]
      %v426 = vld [vmem:[%s236 + $0x1c] sm:$0xf]
      %v427 = vld [vmem:[%s236 + $0x20] sm:$0xf]
      %v428 = vld [vmem:[%s236 + $0x24] sm:$0xf]
      %v429 = vld [vmem:[%s236 + $0x28] sm:$0xf]
      %v430 = vld [vmem:[%s236 + $0x2c] sm:$0xf]
      %v431 = vld [vmem:[%s236 + $0x30] sm:$0xf]
      %v432 = vld [vmem:[%s236 + $0x34] sm:$0xf]
      %v433 = vld [vmem:[%s236 + $0x38] sm:$0xf]
      %v434 = vld [vmem:[%s236 + $0x3c] sm:$0xf]
      %s435 = scalar_lea.vmem %s230, 16
      %v436 = vld [vmem:[%s435] sm:$0xff]
      %v453 = vunpack.c.l.b16 %v419
      %v454 = vunpack.c.l.b16 %v420
      %v455 = vunpack.c.l.b16 %v421
      %v456 = vunpack.c.l.b16 %v422
      %v457 = vunpack.c.l.b16 %v423
      %v458 = vunpack.c.l.b16 %v424
      %v459 = vunpack.c.l.b16 %v425
      %v460 = vunpack.c.l.b16 %v426
      %v461 = vunpack.c.l.b16 %v427
      %v462 = vunpack.c.l.b16 %v428
      %v463 = vunpack.c.l.b16 %v429
      %v464 = vunpack.c.l.b16 %v430
      %v465 = vunpack.c.l.b16 %v431
      %v466 = vunpack.c.l.b16 %v432
      %v467 = vunpack.c.l.b16 %v433
      %v468 = vunpack.c.l.b16 %v434
      %v469 = vpack.c.b16 %v454, %v453
      %v470 = vpack.c.b16 %v456, %v455
      %v471 = vpack.c.b16 %v458, %v457
      %v472 = vpack.c.b16 %v460, %v459
      %v473 = vpack.c.b16 %v462, %v461
      %v474 = vpack.c.b16 %v464, %v463
      %v475 = vpack.c.b16 %v466, %v465
      %v476 = vpack.c.b16 %v468, %v467
      %485 = vmatpush.bf16.msra.mxu0 %v476
      %486 = vmatpush.bf16.msra.mxu0 %v475
      %487 = vmatpush.bf16.msra.mxu0 %v474
      %488 = vmatpush.bf16.msra.mxu0 %v473
      %489 = vmatpush.bf16.msra.mxu0 %v472
      %490 = vmatpush.bf16.msra.mxu0 %v471
      %491 = vmatpush.bf16.msra.mxu0 %v470
      %492 = vmatpush.bf16.msra.mxu0 %v469
      %493 = vmatmul.bf16.gmra.mxu0 %v418
      %v494 = vpop.f32.mrf.mxu0
      %v495 = vadd.f32 %v436, %v494
      %v496 = vpop.f32.mrf.mxu0
      %497 = vdwg.mxu0
      %v498 = vtanh.pop %v495
      %s499 = scalar_lea.vmem %s245, 16
      %500 = vst [vmem:[%s499] sm:$0xff] %v498
      %v501 = vpack.c.bf16 %v498, %v498
      %v502 = vld [vmem:[%s236] sm:$0xf]
      %v503 = vld [vmem:[%s236 + $0x4] sm:$0xf]
      %v504 = vld [vmem:[%s236 + $0x8] sm:$0xf]
      %v505 = vld [vmem:[%s236 + $0xc] sm:$0xf]
      %v506 = vld [vmem:[%s236 + $0x10] sm:$0xf]
      %v507 = vld [vmem:[%s236 + $0x14] sm:$0xf]
      %v508 = vld [vmem:[%s236 + $0x18] sm:$0xf]
      %v509 = vld [vmem:[%s236 + $0x1c] sm:$0xf]
      %v510 = vld [vmem:[%s236 + $0x20] sm:$0xf]
      %v511 = vld [vmem:[%s236 + $0x24] sm:$0xf]
      %v512 = vld [vmem:[%s236 + $0x28] sm:$0xf]
      %v513 = vld [vmem:[%s236 + $0x2c] sm:$0xf]
      %v514 = vld [vmem:[%s236 + $0x30] sm:$0xf]
      %v515 = vld [vmem:[%s236 + $0x34] sm:$0xf]
      %v516 = vld [vmem:[%s236 + $0x38] sm:$0xf]
      %v517 = vld [vmem:[%s236 + $0x3c] sm:$0xf]
      %s518 = scalar_lea.vmem %s230, 24
      %v519 = vld [vmem:[%s518] sm:$0xff]
      %v536 = vunpack.c.l.b16 %v502
      %v537 = vunpack.c.l.b16 %v503
      %v538 = vunpack.c.l.b16 %v504
      %v539 = vunpack.c.l.b16 %v505
      %v540 = vunpack.c.l.b16 %v506
      %v541 = vunpack.c.l.b16 %v507
      %v542 = vunpack.c.l.b16 %v508
      %v543 = vunpack.c.l.b16 %v509
      %v544 = vunpack.c.l.b16 %v510
      %v545 = vunpack.c.l.b16 %v511
      %v546 = vunpack.c.l.b16 %v512
      %v547 = vunpack.c.l.b16 %v513
      %v548 = vunpack.c.l.b16 %v514
      %v549 = vunpack.c.l.b16 %v515
      %v550 = vunpack.c.l.b16 %v516
      %v551 = vunpack.c.l.b16 %v517
      %v552 = vpack.c.b16 %v537, %v536
      %v553 = vpack.c.b16 %v539, %v538
      %v554 = vpack.c.b16 %v541, %v540
      %v555 = vpack.c.b16 %v543, %v542
      %v556 = vpack.c.b16 %v545, %v544
      %v557 = vpack.c.b16 %v547, %v546
      %v558 = vpack.c.b16 %v549, %v548
      %v559 = vpack.c.b16 %v551, %v550
      %568 = vmatpush.bf16.msra.mxu0 %v559
      %569 = vmatpush.bf16.msra.mxu0 %v558
      %570 = vmatpush.bf16.msra.mxu0 %v557
      %571 = vmatpush.bf16.msra.mxu0 %v556
      %572 = vmatpush.bf16.msra.mxu0 %v555
      %573 = vmatpush.bf16.msra.mxu0 %v554
      %574 = vmatpush.bf16.msra.mxu0 %v553
      %575 = vmatpush.bf16.msra.mxu0 %v552
      %576 = vmatmul.bf16.gmra.mxu0 %v501
      %v577 = vpop.f32.mrf.mxu0
      %v578 = vadd.f32 %v519, %v577
      %v579 = vpop.f32.mrf.mxu0
      %580 = vdwg.mxu0
      %v581 = vtanh.pop %v578
      %s582 = scalar_lea.vmem %s245, 24
      %583 = vst [vmem:[%s582] sm:$0xff] %v581
      %v584 = vpack.c.bf16 %v581, %v581
      %v585 = vld [vmem:[%s236] sm:$0xf]
      %v586 = vld [vmem:[%s236 + $0x4] sm:$0xf]
      %v587 = vld [vmem:[%s236 + $0x8] sm:$0xf]
      %v588 = vld [vmem:[%s236 + $0xc] sm:$0xf]
      %v589 = vld [vmem:[%s236 + $0x10] sm:$0xf]
      %v590 = vld [vmem:[%s236 + $0x14] sm:$0xf]
      %v591 = vld [vmem:[%s236 + $0x18] sm:$0xf]
      %v592 = vld [vmem:[%s236 + $0x1c] sm:$0xf]
      %v593 = vld [vmem:[%s236 + $0x20] sm:$0xf]
      %v594 = vld [vmem:[%s236 + $0x24] sm:$0xf]
      %v595 = vld [vmem:[%s236 + $0x28] sm:$0xf]
      %v596 = vld [vmem:[%s236 + $0x2c] sm:$0xf]
      %v597 = vld [vmem:[%s236 + $0x30] sm:$0xf]
      %v598 = vld [vmem:[%s236 + $0x34] sm:$0xf]
      %v599 = vld [vmem:[%s236 + $0x38] sm:$0xf]
      %v600 = vld [vmem:[%s236 + $0x3c] sm:$0xf]
      %s601 = scalar_lea.vmem %s230, 32
      %v602 = vld [vmem:[%s601] sm:$0xff]
      %v619 = vunpack.c.l.b16 %v585
      %v620 = vunpack.c.l.b16 %v586
      %v621 = vunpack.c.l.b16 %v587
      %v622 = vunpack.c.l.b16 %v588
      %v623 = vunpack.c.l.b16 %v589
      %v624 = vunpack.c.l.b16 %v590
      %v625 = vunpack.c.l.b16 %v591
      %v626 = vunpack.c.l.b16 %v592
      %v627 = vunpack.c.l.b16 %v593
      %v628 = vunpack.c.l.b16 %v594
      %v629 = vunpack.c.l.b16 %v595
      %v630 = vunpack.c.l.b16 %v596
      %v631 = vunpack.c.l.b16 %v597
      %v632 = vunpack.c.l.b16 %v598
      %v633 = vunpack.c.l.b16 %v599
      %v634 = vunpack.c.l.b16 %v600
      %v635 = vpack.c.b16 %v620, %v619
      %v636 = vpack.c.b16 %v622, %v621
      %v637 = vpack.c.b16 %v624, %v623
      %v638 = vpack.c.b16 %v626, %v625
      %v639 = vpack.c.b16 %v628, %v627
      %v640 = vpack.c.b16 %v630, %v629
      %v641 = vpack.c.b16 %v632, %v631
      %v642 = vpack.c.b16 %v634, %v633
      %651 = vmatpush.bf16.msra.mxu0 %v642
      %652 = vmatpush.bf16.msra.mxu0 %v641
      %653 = vmatpush.bf16.msra.mxu0 %v640
      %654 = vmatpush.bf16.msra.mxu0 %v639
      %655 = vmatpush.bf16.msra.mxu0 %v638
      %656 = vmatpush.bf16.msra.mxu0 %v637
      %657 = vmatpush.bf16.msra.mxu0 %v636
      %658 = vmatpush.bf16.msra.mxu0 %v635
      %659 = vmatmul.bf16.gmra.mxu0 %v584
      %v660 = vpop.f32.mrf.mxu0
      %v661 = vadd.f32 %v602, %v660
      %v662 = vpop.f32.mrf.mxu0
      %663 = vdwg.mxu0
      %v664 = vtanh.pop %v661
      %s665 = scalar_lea.vmem %s245, 32
      %666 = vst [vmem:[%s665] sm:$0xff] %v664
      %v667 = vpack.c.bf16 %v664, %v664
      %v668 = vld [vmem:[%s236] sm:$0xf]
      %v669 = vld [vmem:[%s236 + $0x4] sm:$0xf]
      %v670 = vld [vmem:[%s236 + $0x8] sm:$0xf]
      %v671 = vld [vmem:[%s236 + $0xc] sm:$0xf]
      %v672 = vld [vmem:[%s236 + $0x10] sm:$0xf]
      %v673 = vld [vmem:[%s236 + $0x14] sm:$0xf]
      %v674 = vld [vmem:[%s236 + $0x18] sm:$0xf]
      %v675 = vld [vmem:[%s236 + $0x1c] sm:$0xf]
      %v676 = vld [vmem:[%s236 + $0x20] sm:$0xf]
      %v677 = vld [vmem:[%s236 + $0x24] sm:$0xf]
      %v678 = vld [vmem:[%s236 + $0x28] sm:$0xf]
      %v679 = vld [vmem:[%s236 + $0x2c] sm:$0xf]
      %v680 = vld [vmem:[%s236 + $0x30] sm:$0xf]
      %v681 = vld [vmem:[%s236 + $0x34] sm:$0xf]
      %v682 = vld [vmem:[%s236 + $0x38] sm:$0xf]
      %v683 = vld [vmem:[%s236 + $0x3c] sm:$0xf]
      %s684 = scalar_lea.vmem %s230, 40
      %v685 = vld [vmem:[%s684] sm:$0xff]
      %v702 = vunpack.c.l.b16 %v668
      %v703 = vunpack.c.l.b16 %v669
      %v704 = vunpack.c.l.b16 %v670
      %v705 = vunpack.c.l.b16 %v671
      %v706 = vunpack.c.l.b16 %v672
      %v707 = vunpack.c.l.b16 %v673
      %v708 = vunpack.c.l.b16 %v674
      %v709 = vunpack.c.l.b16 %v675
      %v710 = vunpack.c.l.b16 %v676
      %v711 = vunpack.c.l.b16 %v677
      %v712 = vunpack.c.l.b16 %v678
      %v713 = vunpack.c.l.b16 %v679
      %v714 = vunpack.c.l.b16 %v680
      %v715 = vunpack.c.l.b16 %v681
      %v716 = vunpack.c.l.b16 %v682
      %v717 = vunpack.c.l.b16 %v683
      %v718 = vpack.c.b16 %v703, %v702
      %v719 = vpack.c.b16 %v705, %v704
      %v720 = vpack.c.b16 %v707, %v706
      %v721 = vpack.c.b16 %v709, %v708
      %v722 = vpack.c.b16 %v711, %v710
      %v723 = vpack.c.b16 %v713, %v712
      %v724 = vpack.c.b16 %v715, %v714
      %v725 = vpack.c.b16 %v717, %v716
      %734 = vmatpush.bf16.msra.mxu0 %v725
      %735 = vmatpush.bf16.msra.mxu0 %v724
      %736 = vmatpush.bf16.msra.mxu0 %v723
      %737 = vmatpush.bf16.msra.mxu0 %v722
      %738 = vmatpush.bf16.msra.mxu0 %v721
      %739 = vmatpush.bf16.msra.mxu0 %v720
      %740 = vmatpush.bf16.msra.mxu0 %v719
      %741 = vmatpush.bf16.msra.mxu0 %v718
      %742 = vmatmul.bf16.gmra.mxu0 %v667
      %v743 = vpop.f32.mrf.mxu0
      %v744 = vadd.f32 %v685, %v743
      %v745 = vpop.f32.mrf.mxu0
      %746 = vdwg.mxu0
      %v747 = vtanh.pop %v744
      %s748 = scalar_lea.vmem %s245, 40
      %749 = vst [vmem:[%s748] sm:$0xff] %v747
      %v750 = vpack.c.bf16 %v747, %v747
      %v751 = vld [vmem:[%s236] sm:$0xf]
      %v752 = vld [vmem:[%s236 + $0x4] sm:$0xf]
      %v753 = vld [vmem:[%s236 + $0x8] sm:$0xf]
      %v754 = vld [vmem:[%s236 + $0xc] sm:$0xf]
      %v755 = vld [vmem:[%s236 + $0x10] sm:$0xf]
      %v756 = vld [vmem:[%s236 + $0x14] sm:$0xf]
      %v757 = vld [vmem:[%s236 + $0x18] sm:$0xf]
      %v758 = vld [vmem:[%s236 + $0x1c] sm:$0xf]
      %v759 = vld [vmem:[%s236 + $0x20] sm:$0xf]
      %v760 = vld [vmem:[%s236 + $0x24] sm:$0xf]
      %v761 = vld [vmem:[%s236 + $0x28] sm:$0xf]
      %v762 = vld [vmem:[%s236 + $0x2c] sm:$0xf]
      %v763 = vld [vmem:[%s236 + $0x30] sm:$0xf]
      %v764 = vld [vmem:[%s236 + $0x34] sm:$0xf]
      %v765 = vld [vmem:[%s236 + $0x38] sm:$0xf]
      %v766 = vld [vmem:[%s236 + $0x3c] sm:$0xf]
      %s767 = scalar_lea.vmem %s230, 48
      %v768 = vld [vmem:[%s767] sm:$0xff]
      %v785 = vunpack.c.l.b16 %v751
      %v786 = vunpack.c.l.b16 %v752
      %v787 = vunpack.c.l.b16 %v753
      %v788 = vunpack.c.l.b16 %v754
      %v789 = vunpack.c.l.b16 %v755
      %v790 = vunpack.c.l.b16 %v756
      %v791 = vunpack.c.l.b16 %v757
      %v792 = vunpack.c.l.b16 %v758
      %v793 = vunpack.c.l.b16 %v759
      %v794 = vunpack.c.l.b16 %v760
      %v795 = vunpack.c.l.b16 %v761
      %v796 = vunpack.c.l.b16 %v762
      %v797 = vunpack.c.l.b16 %v763
      %v798 = vunpack.c.l.b16 %v764
      %v799 = vunpack.c.l.b16 %v765
      %v800 = vunpack.c.l.b16 %v766
      %v801 = vpack.c.b16 %v786, %v785
      %v802 = vpack.c.b16 %v788, %v787
      %v803 = vpack.c.b16 %v790, %v789
      %v804 = vpack.c.b16 %v792, %v791
      %v805 = vpack.c.b16 %v794, %v793
      %v806 = vpack.c.b16 %v796, %v795
      %v807 = vpack.c.b16 %v798, %v797
      %v808 = vpack.c.b16 %v800, %v799
      %817 = vmatpush.bf16.msra.mxu0 %v808
      %818 = vmatpush.bf16.msra.mxu0 %v807
      %819 = vmatpush.bf16.msra.mxu0 %v806
      %820 = vmatpush.bf16.msra.mxu0 %v805
      %821 = vmatpush.bf16.msra.mxu0 %v804
      %822 = vmatpush.bf16.msra.mxu0 %v803
      %823 = vmatpush.bf16.msra.mxu0 %v802
      %824 = vmatpush.bf16.msra.mxu0 %v801
      %825 = vmatmul.bf16.gmra.mxu0 %v750
      %v826 = vpop.f32.mrf.mxu0
      %v827 = vadd.f32 %v768, %v826
      %v828 = vpop.f32.mrf.mxu0
      %829 = vdwg.mxu0
      %v830 = vtanh.pop %v827
      %s831 = scalar_lea.vmem %s245, 48
      %832 = vst [vmem:[%s831] sm:$0xff] %v830
      %v833 = vpack.c.bf16 %v830, %v830
      %v834 = vld [vmem:[%s236] sm:$0xf]
      %v835 = vld [vmem:[%s236 + $0x4] sm:$0xf]
      %v836 = vld [vmem:[%s236 + $0x8] sm:$0xf]
      %v837 = vld [vmem:[%s236 + $0xc] sm:$0xf]
      %v838 = vld [vmem:[%s236 + $0x10] sm:$0xf]
      %v839 = vld [vmem:[%s236 + $0x14] sm:$0xf]
      %v840 = vld [vmem:[%s236 + $0x18] sm:$0xf]
      %v841 = vld [vmem:[%s236 + $0x1c] sm:$0xf]
      %v842 = vld [vmem:[%s236 + $0x20] sm:$0xf]
      %v843 = vld [vmem:[%s236 + $0x24] sm:$0xf]
      %v844 = vld [vmem:[%s236 + $0x28] sm:$0xf]
      %v845 = vld [vmem:[%s236 + $0x2c] sm:$0xf]
      %v846 = vld [vmem:[%s236 + $0x30] sm:$0xf]
      %v847 = vld [vmem:[%s236 + $0x34] sm:$0xf]
      %v848 = vld [vmem:[%s236 + $0x38] sm:$0xf]
      %v849 = vld [vmem:[%s236 + $0x3c] sm:$0xf]
      %s850 = scalar_lea.vmem %s230, 56
      %v851 = vld [vmem:[%s850] sm:$0xff]
      %v868 = vunpack.c.l.b16 %v834
      %v869 = vunpack.c.l.b16 %v835
      %v870 = vunpack.c.l.b16 %v836
      %v871 = vunpack.c.l.b16 %v837
      %v872 = vunpack.c.l.b16 %v838
      %v873 = vunpack.c.l.b16 %v839
      %v874 = vunpack.c.l.b16 %v840
      %v875 = vunpack.c.l.b16 %v841
      %v876 = vunpack.c.l.b16 %v842
      %v877 = vunpack.c.l.b16 %v843
      %v878 = vunpack.c.l.b16 %v844
      %v879 = vunpack.c.l.b16 %v845
      %v880 = vunpack.c.l.b16 %v846
      %v881 = vunpack.c.l.b16 %v847
      %v882 = vunpack.c.l.b16 %v848
      %v883 = vunpack.c.l.b16 %v849
      %v884 = vpack.c.b16 %v869, %v868
      %v885 = vpack.c.b16 %v871, %v870
      %v886 = vpack.c.b16 %v873, %v872
      %v887 = vpack.c.b16 %v875, %v874
      %v888 = vpack.c.b16 %v877, %v876
      %v889 = vpack.c.b16 %v879, %v878
      %v890 = vpack.c.b16 %v881, %v880
      %v891 = vpack.c.b16 %v883, %v882
      %900 = vmatpush.bf16.msra.mxu0 %v891
      %901 = vmatpush.bf16.msra.mxu0 %v890
      %902 = vmatpush.bf16.msra.mxu0 %v889
      %903 = vmatpush.bf16.msra.mxu0 %v888
      %904 = vmatpush.bf16.msra.mxu0 %v887
      %905 = vmatpush.bf16.msra.mxu0 %v886
      %906 = vmatpush.bf16.msra.mxu0 %v885
      %907 = vmatpush.bf16.msra.mxu0 %v884
      %908 = vmatmul.bf16.gmra.mxu0 %v833
      %v909 = vpop.f32.mrf.mxu0
      %v910 = vadd.f32 %v851, %v909
      %v911 = vpop.f32.mrf.mxu0
      %912 = vdwg.mxu0
      %v913 = vtanh.pop %v910
      %s914 = scalar_lea.vmem %s245, 56
      %915 = vst [vmem:[%s914] sm:$0xff] %v913
      %916 = vst [vmem:[#allocation2] sm:$0xff] %v913
      %s917 = smul.u32 8, %s19
      %p918 = scmp.lt.s32.totalorder %s18, 1
      %s919 = scalar_select %p918, %s18, 1
      %p920 = scmp.lt.s32.totalorder %s917, 7
      %s921 = scalar_select %p920, %s917, 7
      %s922 = smul.addr %s919, 8
      %s923 = sadd.s32 %s921, %s922
      %s924 = smul.addr %s923, 8
      %s925 = scalar_lea.vmem %s3, %s924
      // Predicated region
      $region37: #{bidirectional_rnn.1} parent=31 // pred_check
        %p926 = pneg %p126
      $region38: #{bidirectional_rnn.1} parent=31 // pred_check_branch
        %928 = sbr.rel (%p926) target = $region40
      $region39: #{bidirectional_rnn.1} parent=31 // pred_region
        %s929 = smul.u32 8, %s19
      $region40: #{bidirectional_rnn.1} parent=31 // pred_fallthru
        _
    $region32: #{bidirectional_rnn.1} parent=5 // pred_fallthru
      _
    %p930 = scmp.le.s32.totalorder 2, %s9
    // Predicated region
    $region41: #{bidirectional_rnn.1} parent=5 // pred_check
      %p931 = pneg %p930
    $region42: #{bidirectional_rnn.1} parent=5 // pred_check_branch
      %933 = sbr.rel (%p931) target = $region44
    $region43: #{bidirectional_rnn.1} parent=5 // pred_region
      %s934 = ssub.s32 %s9, 2
      // Predicated region
      $region45: #{bidirectional_rnn.1} parent=43 // pred_check
        %p935 = pneg %p132
      $region46: #{bidirectional_rnn.1} parent=43 // pred_check_branch
        %937 = sbr.rel (%p935) target = $region48
      $region47: #{bidirectional_rnn.1} parent=43 // pred_region
        %s938 = smul.u32 8, %s21
        %p939 = scmp.lt.s32.totalorder %s20, 1
        %s940 = scalar_select %p939, %s20, 1
        %p941 = scmp.lt.s32.totalorder %s938, 7
        %s942 = scalar_select %p941, %s938, 7
        %s943 = smul.addr %s940, 8
        %s944 = sadd.s32 %s942, %s943
        %s945 = smul.addr %s944, 8
        %s946 = scalar_lea.vmem %s3, %s945
      $region48: #{bidirectional_rnn.1} parent=43 // pred_fallthru
        _
    $region44: #{bidirectional_rnn.1} parent=5 // pred_fallthru
      _
  $region6: #{bidirectional_rnn.1} parent=0 // loop_footer
    %s13 = sadd.s32 1, %s9
  $region7: #{bidirectional_rnn.1} parent=0 // loop_footer_branch
    %8 = sbr.rel target = $region3
  $region8: #{bidirectional_rnn.1} parent=0 // loop_exit
    _

</llo_original>
